<compile_context>
chip_gen: v7x
topology: tpu7x:2x2x1
jax: 0.10.0
libtpu: 0.0.40
codegen_flags: <defaults>
</compile_context>

<pallas_src>
import math

import jax
import jax.numpy as jnp
from jax.experimental import pallas as pl
from jax.experimental.pallas import tpu as pltpu

_MIB = 1024 * 1024


def _vmem_capacity_bytes() -> int:
    """Physical per-core VMEM; conservative fallback = v7x's 64 MiB."""
    try:
        cap = int(pltpu.get_tpu_info().vmem_capacity_bytes)
        if cap > 0:
            return cap
    except Exception:
        pass
    return 64 * _MIB


def _pick_ff_chunk(d_ff: int) -> int:
    """Lane-aligned d_ff chunk for the in-kernel hidden (<=512 wide)."""
    if d_ff <= 512:
        return d_ff
    for c in (512, 256, 128):
        if d_ff % c == 0:
            return c
    return d_ff


def _pick_tile_m(n: int, d_ff: int, cap: int) -> int:
    if d_ff >= 8192:
        base = 256
    elif cap >= 96 * _MIB and d_ff <= 4096:
        base = 1024                     # v5e/v6e: amortize per-grid-step overhead
    else:
        base = 512                      # v7x (64 MiB VMEM) default
    if n > base:
        return base
    if n > 256:                         # >=2 "parallel" steps so both v7x TCs get work
        return (((n + 1) // 2) + 7) // 8 * 8
    return n                            # tiny input: full-array block (always legal)


# ---------------------------------------------------------------------------
# Resident-weight kernel: weights live in VMEM, d_ff chunked in-kernel.
# ---------------------------------------------------------------------------
def _make_resident_kernel(d_ff: int, chunk: int):
    n_chunks = d_ff // chunk

    def kernel(x_ref, w1_ref, b1_ref, w2_ref, b2_ref, o_ref):
        x = x_ref[...].astype(w1_ref.dtype)           # no-op when x is already bf16
        y = None
        for c in range(n_chunks):                     # static unroll over d_ff chunks
            lo = c * chunk
            h = jnp.dot(x, w1_ref[:, pl.ds(lo, chunk)],
                        preferred_element_type=jnp.float32)
            h = jnp.maximum(h + b1_ref[:, pl.ds(lo, chunk)], 0.0)
            # TODO(synk): training-mode dropout on `h` not reproduced (eval identity).
            p = jnp.dot(h.astype(w2_ref.dtype), w2_ref[pl.ds(lo, chunk), :],
                        preferred_element_type=jnp.float32)
            # Value accumulator (no explicit VMEM RMW): Mosaic may accumulate
            # in place on the MXU result buffer (MRB) on v7x.
            y = p if y is None else y + p
        o_ref[...] = (y + b2_ref[...]).astype(o_ref.dtype)

    return kernel


# ---------------------------------------------------------------------------
# P3 weight-streaming kernel: d_ff is an "arbitrary" grid axis, weight tiles
# are streamed from HBM, the f32 y accumulator lives in VMEM scratch.
# ---------------------------------------------------------------------------
def _streaming_kernel(x_ref, w1_ref, b1_ref, w2_ref, b2_ref, o_ref, acc_ref):
    k = pl.program_id(1)

    @pl.when(k == 0)
    def _():
        acc_ref[...] = jnp.zeros_like(acc_ref)

    x = x_ref[...].astype(w1_ref.dtype)
    h = jnp.dot(x, w1_ref[...], preferred_element_type=jnp.float32)
    h = jnp.maximum(h + b1_ref[...], 0.0)
    # TODO(synk): training-mode dropout on `h` not reproduced (eval identity).
    acc_ref[...] += jnp.dot(h.astype(w2_ref.dtype), w2_ref[...],
                            preferred_element_type=jnp.float32)

    @pl.when(k == pl.num_programs(1) - 1)
    def _():
        o_ref[...] = (acc_ref[...] + b2_ref[...]).astype(o_ref.dtype)


# ---------------------------------------------------------------------------
# Host wrapper
# ---------------------------------------------------------------------------
def positionwise_ffn(x2d, w1_t, b1, w2_t, b2, *, force_stream=False):
    """x2d: (N, d_model); w1_t: (d_model, d_ff); w2_t: (d_ff, d_model)."""
    N, d_model = x2d.shape
    d_ff = w1_t.shape[1]
    assert w1_t.shape == (d_model, d_ff) and w2_t.shape == (d_ff, d_model)
    assert b1.shape == (1, d_ff) and b2.shape == (1, d_model)

    cap = _vmem_capacity_bytes()
    budget = cap - 12 * _MIB                 # slack for compiler-internal scratch
    tile_m = _pick_tile_m(N, d_ff, cap)
    out_dtype = x2d.dtype                    # bf16 in -> bf16 out
    wdt = w1_t.dtype.itemsize

    io_bytes = 2 * tile_m * d_model * (x2d.dtype.itemsize + jnp.dtype(out_dtype).itemsize)
    acc_bytes = tile_m * d_model * 4

    chunk = _pick_ff_chunk(d_ff)
    w_res_bytes = (w1_t.size + w2_t.size) * wdt + (b1.size + b2.size) * 4
    res_need = w_res_bytes + io_bytes + tile_m * chunk * (4 + wdt) + acc_bytes

    use_stream = force_stream or (res_need > budget)

    if not use_stream:
        kernel = _make_resident_kernel(d_ff, chunk)
        grid = (pl.cdiv(N, tile_m),)

        def call(single_buffer):
            kw = dict(pipeline_mode=pl.Buffered(1)) if single_buffer else {}
            need = res_need + (0 if single_buffer else w_res_bytes)
            limit = int(min(budget, max(32 * _MIB, need + need // 4)))
            return pl.pallas_call(
                kernel,
                out_shape=jax.ShapeDtypeStruct((N, d_model), out_dtype),
                grid=grid,
                in_specs=[
                    pl.BlockSpec((tile_m, d_model), lambda i: (i, 0)),        # x tile
                    pl.BlockSpec((d_model, d_ff), lambda i: (0, 0), **kw),    # W1^T resident
                    pl.BlockSpec((1, d_ff), lambda i: (0, 0), **kw),          # b1 resident
                    pl.BlockSpec((d_ff, d_model), lambda i: (0, 0), **kw),    # W2^T resident
                    pl.BlockSpec((1, d_model), lambda i: (0, 0), **kw),       # b2 resident
                ],
                out_specs=pl.BlockSpec((tile_m, d_model), lambda i: (i, 0)),
                compiler_params=pltpu.CompilerParams(
                    dimension_semantics=("parallel",),
                    vmem_limit_bytes=limit,
                ),
            )(x2d, w1_t, b1, w2_t, b2)

        try:
            return call(single_buffer=True)
        except Exception:
            # Fallback if this jax build rejects pl.Buffered(1) on pallas_call inputs.
            return call(single_buffer=False)

    # ---- P3 weight-streaming branch ----
    tk = d_ff
    for c in (2048, 1024, 512, 256, 128):
        if d_ff % c == 0:
            tk = c
            break
    grid = (pl.cdiv(N, tile_m), d_ff // tk)
    stream_need = (io_bytes + acc_bytes
                   + 2 * 2 * d_model * tk * wdt          # double-buffered W1/W2 tiles
                   + 2 * (tk + d_model) * 4               # bias tiles
                   + tile_m * tk * (4 + wdt))             # f32 hidden chunk + bf16 copy
    vmem_limit = int(min(budget, max(32 * _MIB, stream_need + stream_need // 4)))

    return pl.pallas_call(
        _streaming_kernel,
        out_shape=jax.ShapeDtypeStruct((N, d_model), out_dtype),
        grid=grid,
        in_specs=[
            pl.BlockSpec((tile_m, d_model), lambda i, k: (i, 0)),
            pl.BlockSpec((d_model, tk), lambda i, k: (0, k)),
            pl.BlockSpec((1, tk), lambda i, k: (0, k)),
            pl.BlockSpec((tk, d_model), lambda i, k: (k, 0)),
            pl.BlockSpec((1, d_model), lambda i, k: (0, 0)),
        ],
        out_specs=pl.BlockSpec((tile_m, d_model), lambda i, k: (i, 0)),
        scratch_shapes=[pltpu.VMEM((tile_m, d_model), jnp.float32)],
        compiler_params=pltpu.CompilerParams(
            dimension_semantics=("parallel", "arbitrary"),
            vmem_limit_bytes=vmem_limit,
        ),
    )(x2d, w1_t, b1, w2_t, b2)


# ---------------------------------------------------------------------------
# Module wrapper (forward only, eval-mode dropout)
# ---------------------------------------------------------------------------
class PositionwiseFeedForwardPallas:
    def __init__(self, d_model, d_ff, key, dropout=0.1, param_dtype=jnp.bfloat16):
        self.d_model, self.d_ff = d_model, d_ff
        k1, k2, k3, k4 = jax.random.split(key, 4)
        # nn.Linear default init: U(-1/sqrt(fan_in), 1/sqrt(fan_in))
        bnd1 = 1.0 / math.sqrt(d_model)
        bnd2 = 1.0 / math.sqrt(d_ff)
        w1 = jax.random.uniform(k1, (d_ff, d_model), jnp.float32, -bnd1, bnd1)
        b1 = jax.random.uniform(k2, (d_ff,), jnp.float32, -bnd1, bnd1)
        w2 = jax.random.uniform(k3, (d_model, d_ff), jnp.float32, -bnd2, bnd2)
        b2 = jax.random.uniform(k4, (d_model,), jnp.float32, -bnd2, bnd2)
        # Pre-transpose once so the kernel never relayouts; store bf16 MXU operands.
        self.w1_t = w1.T.astype(param_dtype)     # (d_model, d_ff)
        self.w2_t = w2.T.astype(param_dtype)     # (d_ff, d_model)
        self.b1 = b1.reshape(1, d_ff)            # f32
        self.b2 = b2.reshape(1, d_model)         # f32

    def __call__(self, x, *, force_stream=False):
        shp = x.shape
        y = positionwise_ffn(x.reshape(-1, shp[-1]), self.w1_t, self.b1,
                             self.w2_t, self.b2, force_stream=force_stream)
        return y.reshape(shp)

    def reference(self, x):
        """Pure-JAX reference using the same bf16-quantized operands (f32 accum)."""
        xb = x.astype(jnp.bfloat16).astype(jnp.float32)
        w1 = self.w1_t.astype(jnp.float32)
        w2 = self.w2_t.astype(jnp.float32)
        h = jnp.maximum(xb @ w1 + self.b1, 0.0)
        hb = h.astype(jnp.bfloat16).astype(jnp.float32)
        return (hb @ w2 + self.b2).astype(x.dtype)


if __name__ == "__main__":
    B, S, d_model, d_ff = 2, 8, 32, 64

    root = jax.random.PRNGKey(0)
    kx, kp = jax.random.split(root)
    x = jax.random.normal(kx, (B, S, d_model), jnp.float32)

    ffn = PositionwiseFeedForwardPallas(d_model, d_ff, kp)

    # Resident-weight path.
    out = jax.block_until_ready(ffn(x))
    assert out.shape == (B, S, d_model)
    assert bool(jnp.all(jnp.isfinite(out)))

    ref = ffn.reference(x)
    assert bool(jnp.allclose(out, ref, rtol=1e-2, atol=1e-2))

    # P3 weight-streaming path must agree with the resident path.
    out_stream = jax.block_until_ready(ffn(x, force_stream=True))
    assert bool(jnp.allclose(out, out_stream, rtol=1e-3, atol=1e-3))

    print("KERNEL_OK")
</pallas_src>

<mosaic_0001>
module attributes {stable_mosaic.version = 11 : i64} {
  func.func @kernel(%arg0: i32, %arg1: memref<16x32xf32, #tpu.memory_space<vmem>>, %arg2: memref<32x64xbf16, #tpu.memory_space<vmem>>, %arg3: memref<1x64xf32, #tpu.memory_space<vmem>>, %arg4: memref<64x32xbf16, #tpu.memory_space<vmem>>, %arg5: memref<1x32xf32, #tpu.memory_space<vmem>>, %arg6: memref<16x32xf32, #tpu.memory_space<vmem>>) attributes {dimension_semantics = [#tpu.dimension_semantics<parallel>], iteration_bounds = array<i64: 1>, scalar_prefetch = 0 : i64, scratch_operands = 0 : i64, tpu.core_type = #tpu.core_type<tc>, window_params = [{transform_indices = @transform_0, window_bounds = array<i64: 16, 32>}, {pipeline_mode = #tpu.pipeline_mode<synchronous>, transform_indices = @transform_1, window_bounds = array<i64: 32, 64>}, {pipeline_mode = #tpu.pipeline_mode<synchronous>, transform_indices = @transform_2, window_bounds = array<i64: 1, 64>}, {pipeline_mode = #tpu.pipeline_mode<synchronous>, transform_indices = @transform_3, window_bounds = array<i64: 64, 32>}, {pipeline_mode = #tpu.pipeline_mode<synchronous>, transform_indices = @transform_4, window_bounds = array<i64: 1, 32>}, {transform_indices = @transform_5, window_bounds = array<i64: 16, 32>}]} {
    %c0 = arith.constant 0 : index
    %c0_0 = arith.constant 0 : index
    %0 = vector.load %arg1[%c0, %c0_0] : memref<16x32xf32, #tpu.memory_space<vmem>>, vector<16x32xf32>
    %1 = arith.truncf %0 : vector<16x32xf32> to vector<16x32xbf16>
    %c0_1 = arith.constant 0 : index
    %c0_2 = arith.constant 0 : index
    %2 = vector.load %arg2[%c0_1, %c0_2] : memref<32x64xbf16, #tpu.memory_space<vmem>>, vector<32x64xbf16>
    %cst = arith.constant dense<0.000000e+00> : vector<16x64xf32>
    %3 = tpu.matmul %1, %2, %cst {dimension_numbers = #tpu.dot_dimension_numbers<[1], [0], [0], [1], [0, 0, 1, 1], [], []>} : vector<16x32xbf16>, vector<32x64xbf16>, vector<16x64xf32> -> vector<16x64xf32>
    %c0_3 = arith.constant 0 : index
    %c0_4 = arith.constant 0 : index
    %4 = vector.load %arg3[%c0_3, %c0_4] : memref<1x64xf32, #tpu.memory_space<vmem>>, vector<1x64xf32>
    %5 = vector.broadcast %4 : vector<1x64xf32> to vector<16x64xf32>
    %6 = arith.addf %3, %5 : vector<16x64xf32>
    %cst_5 = arith.constant 0.000000e+00 : f32
    %7 = vector.broadcast %cst_5 : f32 to vector<16x64xf32>
    %8 = arith.maximumf %6, %7 : vector<16x64xf32>
    %9 = arith.truncf %8 : vector<16x64xf32> to vector<16x64xbf16>
    %c0_6 = arith.constant 0 : index
    %c0_7 = arith.constant 0 : index
    %10 = vector.load %arg4[%c0_6, %c0_7] : memref<64x32xbf16, #tpu.memory_space<vmem>>, vector<64x32xbf16>
    %cst_8 = arith.constant dense<0.000000e+00> : vector<16x32xf32>
    %11 = tpu.matmul %9, %10, %cst_8 {dimension_numbers = #tpu.dot_dimension_numbers<[1], [0], [0], [1], [0, 0, 1, 1], [], []>} : vector<16x64xbf16>, vector<64x32xbf16>, vector<16x32xf32> -> vector<16x32xf32>
    %c0_9 = arith.constant 0 : index
    %c0_10 = arith.constant 0 : index
    %12 = vector.load %arg5[%c0_9, %c0_10] : memref<1x32xf32, #tpu.memory_space<vmem>>, vector<1x32xf32>
    %13 = vector.broadcast %12 : vector<1x32xf32> to vector<16x32xf32>
    %14 = arith.addf %11, %13 : vector<16x32xf32>
    %c0_11 = arith.constant 0 : index
    %c0_12 = arith.constant 0 : index
    %15 = vector.load %arg6[%c0_11, %c0_12] : memref<16x32xf32, #tpu.memory_space<vmem>>, vector<16x32xf32>
    tpu.vector_store %arg6[%c0_11, %c0_12], %14 {strides = array<i32>} : memref<16x32xf32, #tpu.memory_space<vmem>>, vector<16x32xf32>,
    return
  }
  func.func @transform_0(%arg0: i32) -> (i32, i32) {
    %c0_i32 = arith.constant 0 : i32
    %c0_i32_0 = arith.constant 0 : i32
    return %arg0, %c0_i32 : i32, i32
  }
  func.func @transform_1(%arg0: i32) -> (i32, i32) {
    %c0_i32 = arith.constant 0 : i32
    %c0_i32_0 = arith.constant 0 : i32
    %c0_i32_1 = arith.constant 0 : i32
    return %c0_i32, %c0_i32_0 : i32, i32
  }
  func.func @transform_2(%arg0: i32) -> (i32, i32) {
    %c0_i32 = arith.constant 0 : i32
    %c0_i32_0 = arith.constant 0 : i32
    %c0_i32_1 = arith.constant 0 : i32
    return %c0_i32, %c0_i32_0 : i32, i32
  }
  func.func @transform_3(%arg0: i32) -> (i32, i32) {
    %c0_i32 = arith.constant 0 : i32
    %c0_i32_0 = arith.constant 0 : i32
    %c0_i32_1 = arith.constant 0 : i32
    return %c0_i32, %c0_i32_0 : i32, i32
  }
  func.func @transform_4(%arg0: i32) -> (i32, i32) {
    %c0_i32 = arith.constant 0 : i32
    %c0_i32_0 = arith.constant 0 : i32
    %c0_i32_1 = arith.constant 0 : i32
    return %c0_i32, %c0_i32_0 : i32, i32
  }
  func.func @transform_5(%arg0: i32) -> (i32, i32) {
    %c0_i32 = arith.constant 0 : i32
    %c0_i32_0 = arith.constant 0 : i32
    return %arg0, %c0_i32 : i32, i32
  }
}

module attributes {stable_mosaic.version = 11 : i64} {
  func.func @kernel(%arg0: i32, %arg1: memref<16x32xf32, #tpu.memory_space<vmem>>, %arg2: memref<32x64xbf16, #tpu.memory_space<vmem>>, %arg3: memref<1x64xf32, #tpu.memory_space<vmem>>, %arg4: memref<64x32xbf16, #tpu.memory_space<vmem>>, %arg5: memref<1x32xf32, #tpu.memory_space<vmem>>, %arg6: memref<16x32xf32, #tpu.memory_space<vmem>>) attributes {dimension_semantics = [#tpu.dimension_semantics<parallel>], iteration_bounds = array<i64: 1>, scalar_prefetch = 0 : i64, scratch_operands = 0 : i64, tpu.core_type = #tpu.core_type<tc>, window_params = [{transform_indices = @transform_0, window_bounds = array<i64: 16, 32>}, {pipeline_mode = #tpu.pipeline_mode<synchronous>, transform_indices = @transform_1, window_bounds = array<i64: 32, 64>}, {pipeline_mode = #tpu.pipeline_mode<synchronous>, transform_indices = @transform_2, window_bounds = array<i64: 1, 64>}, {pipeline_mode = #tpu.pipeline_mode<synchronous>, transform_indices = @transform_3, window_bounds = array<i64: 64, 32>}, {pipeline_mode = #tpu.pipeline_mode<synchronous>, transform_indices = @transform_4, window_bounds = array<i64: 1, 32>}, {transform_indices = @transform_5, window_bounds = array<i64: 16, 32>}]} {
    %c0 = arith.constant 0 : index
    %c0_0 = arith.constant 0 : index
    %0 = vector.load %arg1[%c0, %c0_0] : memref<16x32xf32, #tpu.memory_space<vmem>>, vector<16x32xf32>
    %1 = arith.truncf %0 : vector<16x32xf32> to vector<16x32xbf16>
    %c0_1 = arith.constant 0 : index
    %c0_2 = arith.constant 0 : index
    %2 = vector.load %arg2[%c0_1, %c0_2] : memref<32x64xbf16, #tpu.memory_space<vmem>>, vector<32x64xbf16>
    %cst = arith.constant dense<0.000000e+00> : vector<16x64xf32>
    %3 = tpu.matmul %1, %2, %cst {dimension_numbers = #tpu.dot_dimension_numbers<[1], [0], [0], [1], [0, 0, 1, 1], [], []>} : vector<16x32xbf16>, vector<32x64xbf16>, vector<16x64xf32> -> vector<16x64xf32>
    %c0_3 = arith.constant 0 : index
    %c0_4 = arith.constant 0 : index
    %4 = vector.load %arg3[%c0_3, %c0_4] : memref<1x64xf32, #tpu.memory_space<vmem>>, vector<1x64xf32>
    %5 = vector.broadcast %4 : vector<1x64xf32> to vector<16x64xf32>
    %6 = arith.addf %3, %5 : vector<16x64xf32>
    %cst_5 = arith.constant 0.000000e+00 : f32
    %7 = vector.broadcast %cst_5 : f32 to vector<16x64xf32>
    %8 = arith.maximumf %6, %7 : vector<16x64xf32>
    %9 = arith.truncf %8 : vector<16x64xf32> to vector<16x64xbf16>
    %c0_6 = arith.constant 0 : index
    %c0_7 = arith.constant 0 : index
    %10 = vector.load %arg4[%c0_6, %c0_7] : memref<64x32xbf16, #tpu.memory_space<vmem>>, vector<64x32xbf16>
    %cst_8 = arith.constant dense<0.000000e+00> : vector<16x32xf32>
    %11 = tpu.matmul %9, %10, %cst_8 {dimension_numbers = #tpu.dot_dimension_numbers<[1], [0], [0], [1], [0, 0, 1, 1], [], []>} : vector<16x64xbf16>, vector<64x32xbf16>, vector<16x32xf32> -> vector<16x32xf32>
    %c0_9 = arith.constant 0 : index
    %c0_10 = arith.constant 0 : index
    %12 = vector.load %arg5[%c0_9, %c0_10] : memref<1x32xf32, #tpu.memory_space<vmem>>, vector<1x32xf32>
    %13 = vector.broadcast %12 : vector<1x32xf32> to vector<16x32xf32>
    %14 = arith.addf %11, %13 : vector<16x32xf32>
    %c0_11 = arith.constant 0 : index
    %c0_12 = arith.constant 0 : index
    %15 = vector.load %arg6[%c0_11, %c0_12] : memref<16x32xf32, #tpu.memory_space<vmem>>, vector<16x32xf32>
    tpu.vector_store %arg6[%c0_11, %c0_12], %14 {strides = array<i32>} : memref<16x32xf32, #tpu.memory_space<vmem>>, vector<16x32xf32>,
    return
  }
  func.func @transform_0(%arg0: i32) -> (i32, i32) {
    %c0_i32 = arith.constant 0 : i32
    %c0_i32_0 = arith.constant 0 : i32
    return %arg0, %c0_i32 : i32, i32
  }
  func.func @transform_1(%arg0: i32) -> (i32, i32) {
    %c0_i32 = arith.constant 0 : i32
    %c0_i32_0 = arith.constant 0 : i32
    %c0_i32_1 = arith.constant 0 : i32
    return %c0_i32, %c0_i32_0 : i32, i32
  }
  func.func @transform_2(%arg0: i32) -> (i32, i32) {
    %c0_i32 = arith.constant 0 : i32
    %c0_i32_0 = arith.constant 0 : i32
    %c0_i32_1 = arith.constant 0 : i32
    return %c0_i32, %c0_i32_0 : i32, i32
  }
  func.func @transform_3(%arg0: i32) -> (i32, i32) {
    %c0_i32 = arith.constant 0 : i32
    %c0_i32_0 = arith.constant 0 : i32
    %c0_i32_1 = arith.constant 0 : i32
    return %c0_i32, %c0_i32_0 : i32, i32
  }
  func.func @transform_4(%arg0: i32) -> (i32, i32) {
    %c0_i32 = arith.constant 0 : i32
    %c0_i32_0 = arith.constant 0 : i32
    %c0_i32_1 = arith.constant 0 : i32
    return %c0_i32, %c0_i32_0 : i32, i32
  }
  func.func @transform_5(%arg0: i32) -> (i32, i32) {
    %c0_i32 = arith.constant 0 : i32
    %c0_i32_0 = arith.constant 0 : i32
    return %arg0, %c0_i32 : i32, i32
  }
}

</mosaic_0001>

<llo_original>
// kernel: tpu_custom_call.1
$region0: #{tpu_custom_call.1}
  #allocation0 [shape = 'u32[]', space=smem, size = 0x4, offset = 0x4, fixed_abs, tag = 'smem constant byte address 0x4 - core index']
  #allocation1 [shape = 'u32[144,128]{1,0:T(1,128)}', space=vmem, size = 0x12000, scoped, tag = 'internal scratch']
  %s0 = inlined_call_operand.vmem [shape: f32[16,32], index: 0, kind: input, shape index: {}]
  %s1 = inlined_call_operand.vmem [shape: bf16[32,64], index: 1, kind: input, shape index: {}]
  %s2 = inlined_call_operand.vmem [shape: f32[1,64], index: 2, kind: input, shape index: {}]
  %s3 = inlined_call_operand.vmem [shape: bf16[64,32], index: 3, kind: input, shape index: {}]
  %s4 = inlined_call_operand.vmem [shape: f32[1,32], index: 4, kind: input, shape index: {}]
  %s5 = inlined_call_operand.hbm [shape: f32[16,32], index: 5, kind: output, shape index: {}]
  %s6 = sld [smem:[#allocation0]]
  $region30: #{tpu_custom_call.1} parent=0
    _
  %s8 = ssub.s32 1, %s6
  %s9 = scalar_select 0, %s8, %s6
  $region1: #{tpu_custom_call.1} parent=0
    #allocation2 [shape = 'u8[8192]{0}', space=vmem, size = 0x2000, scoped, tag = 'output window, operand 0, single buffered']
    #allocation3 [shape = 's32[1]{0}', space=sflag, size = 0x4, scoped, tag = 'scoped memory for tpu_custom_call.1']
    %10 = vsyncpa [#allocation3], 0
    // Predicated region
    $region2: #{tpu_custom_call.1} parent=1 // pred_check
      _
    $region3: #{tpu_custom_call.1} parent=1 // pred_check_branch
      %12 = sbr.rel (0) target = $region5
    $region4: #{tpu_custom_call.1} parent=1 // pred_region
      _
    $region5: #{tpu_custom_call.1} parent=1 // pred_fallthru
      _
    // Predicated region
    $region6: #{tpu_custom_call.1} parent=1 // pred_check
      _
    $region7: #{tpu_custom_call.1} parent=1 // pred_check_branch
      %14 = sbr.rel (0) target = $region9
    $region8: #{tpu_custom_call.1} parent=1 // pred_region
      _
    $region9: #{tpu_custom_call.1} parent=1 // pred_fallthru
      _
    // Predicated region
    $region10: #{tpu_custom_call.1} parent=1 // pred_check
      _
    $region11: #{tpu_custom_call.1} parent=1 // pred_check_branch
      %16 = sbr.rel (0) target = $region13
    $region12: #{tpu_custom_call.1} parent=1 // pred_region
      _
    $region13: #{tpu_custom_call.1} parent=1 // pred_fallthru
      _
    // Predicated region
    $region14: #{tpu_custom_call.1} parent=1 // pred_check
      _
    $region15: #{tpu_custom_call.1} parent=1 // pred_check_branch
      %18 = sbr.rel (0) target = $region17
    $region16: #{tpu_custom_call.1} parent=1 // pred_region
      _
    $region17: #{tpu_custom_call.1} parent=1 // pred_fallthru
      _
    // Predicated region
    $region18: #{tpu_custom_call.1} parent=1 // pred_check
      _
    $region19: #{tpu_custom_call.1} parent=1 // pred_check_branch
      %20 = sbr.rel (0) target = $region21
    $region20: #{tpu_custom_call.1} parent=1 // pred_region
      _
    $region21: #{tpu_custom_call.1} parent=1 // pred_fallthru
      _
    %v22 = vld [vmem:[%s0] sm:$0xff]
    %v23 = vld [vmem:[%s0 + $0x8] sm:$0xff]
    %v24 = vpack.c.bf16 %v23, %v22
    %v25 = vld [vmem:[%s1] sm:$0xf]
    %v26 = vld [vmem:[%s1 + $0x4] sm:$0xf]
    %v27 = vld [vmem:[%s1 + $0x8] sm:$0xf]
    %v28 = vld [vmem:[%s1 + $0xc] sm:$0xf]
    %v29 = vld [vmem:[%s2] sm:$0x1]
    %v31 = vlaneseq
    %v32 = vshrl.u32 %v31, 7
    %v33 = vsub.s32 0, %v32
    %v34 = vrot.slane %v29, %v33
    %v40 = vunpack.c.l.b16 %v25
    %v41 = vunpack.c.l.b16 %v26
    %v42 = vunpack.c.l.b16 %v27
    %v43 = vunpack.c.l.b16 %v28
    %v44 = vpack.c.b16 %v41, %v40
    %v45 = vpack.c.b16 %v43, %v42
    %vm48 = vcmask 261120
    %v50 = vsel %vm48, %v24, 0
    %52 = vmatprep.subr.bf16.mxu0 0
    %53 = vmatpush1.bf16.msra.mxu0 %v44
    %54 = vmatprep.subr.bf16.mxu0 0
    %55 = vmatpush1.bf16.msra.mxu0 %v45
    %56 = vmatprep.subr.bf16.mxu0 0
    %57 = vmatpush1.bf16.msra.mxu0 0
    %58 = vmatprep.subr.bf16.mxu0 0
    %59 = vmatpush1.bf16.msra.mxu0 0
    %60 = vmatprep.subr.bf16.mxu0 0
    %61 = vmatpush1.bf16.msra.mxu0 0
    %62 = vmatprep.subr.bf16.mxu0 0
    %63 = vmatpush1.bf16.msra.mxu0 0
    %64 = vmatprep.subr.bf16.mxu0 0
    %65 = vmatpush1.bf16.msra.mxu0 0
    %66 = vmatprep.subr.bf16.mxu0 0
    %67 = vmatpush1.bf16.msra.mxu0 0
    %68 = vmatprep.subr.bf16.mxu0 0
    %69 = vmatpush1.bf16.msra.mxu0 0
    %70 = vmatprep.subr.bf16.mxu0 0
    %71 = vmatpush1.bf16.msra.mxu0 0
    %72 = vmatprep.subr.bf16.mxu0 0
    %73 = vmatpush1.bf16.msra.mxu0 0
    %74 = vmatprep.subr.bf16.mxu0 0
    %75 = vmatpush1.bf16.msra.mxu0 0
    %76 = vmatprep.subr.bf16.mxu0 0
    %77 = vmatpush1.bf16.msra.mxu0 0
    %78 = vmatprep.subr.bf16.mxu0 0
    %79 = vmatpush1.bf16.msra.mxu0 0
    %80 = vmatprep.subr.bf16.mxu0 0
    %81 = vmatpush1.bf16.msra.mxu0 0
    %82 = vmatprep.subr.bf16.mxu0 0
    %83 = vmatpush1.bf16.msra.mxu0 0
    %84 = vmatprep.mubr.bf16.mxu0 0
    %85 = vmatmul.mubr.bf16.gmra.mrb[0].mxu0 %v50
    %v86 = vpop.f32.mrb[0].mxu0
    %v87 = vadd.f32 %v34, %v86
    %v88 = vpop.f32.mrb[0].mxu0
    %v89 = vpop.f32.mrb[0].mxu0
    %v90 = vadd.f32 %v34, %v89
    %v91 = vpop.f32.mrb[0].mxu0
    %92 = vdwg.mxu0
    %v93 = vmax.f32 %v87, 0.0
    %v94 = vmax.f32 %v90, 0.0
    %v95 = vpack.c.bf16 %v94, %v93
    %v96 = vld [vmem:[%s3] sm:$0xf]
    %v97 = vld [vmem:[%s3 + $0x4] sm:$0xf]
    %v98 = vld [vmem:[%s3 + $0x8] sm:$0xf]
    %v99 = vld [vmem:[%s3 + $0xc] sm:$0xf]
    %v100 = vld [vmem:[%s3 + $0x10] sm:$0xf]
    %v101 = vld [vmem:[%s3 + $0x14] sm:$0xf]
    %v102 = vld [vmem:[%s3 + $0x18] sm:$0xf]
    %v103 = vld [vmem:[%s3 + $0x1c] sm:$0xf]
    %v104 = vld [vmem:[%s4] sm:$0x1]
    %v106 = vlaneseq
    %v107 = vshrl.u32 %v106, 7
    %v108 = vsub.s32 0, %v107
    %v109 = vrot.slane %v104, %v108
    %v119 = vunpack.c.l.b16 %v96
    %v120 = vunpack.c.l.b16 %v97
    %v121 = vunpack.c.l.b16 %v98
    %v122 = vunpack.c.l.b16 %v99
    %v123 = vunpack.c.l.b16 %v100
    %v124 = vunpack.c.l.b16 %v101
    %v125 = vunpack.c.l.b16 %v102
    %v126 = vunpack.c.l.b16 %v103
    %v127 = vpack.c.b16 %v120, %v119
    %v128 = vpack.c.b16 %v122, %v121
    %v129 = vpack.c.b16 %v124, %v123
    %v130 = vpack.c.b16 %v126, %v125
    %vm135 = vcmask 523264
    %v137 = vsel %vm135, %v95, 0
    %139 = vmatprep.subr.bf16.mxu0 0
    %140 = vmatpush1.bf16.msra.mxu0 %v127
    %141 = vmatprep.subr.bf16.mxu0 0
    %142 = vmatpush1.bf16.msra.mxu0 %v128
    %143 = vmatprep.subr.bf16.mxu0 0
    %144 = vmatpush1.bf16.msra.mxu0 %v129
    %145 = vmatprep.subr.bf16.mxu0 0
    %146 = vmatpush1.bf16.msra.mxu0 %v130
    %147 = vmatprep.subr.bf16.mxu0 0
    %148 = vmatpush1.bf16.msra.mxu0 0
    %149 = vmatprep.subr.bf16.mxu0 0
    %150 = vmatpush1.bf16.msra.mxu0 0
    %151 = vmatprep.subr.bf16.mxu0 0
    %152 = vmatpush1.bf16.msra.mxu0 0
    %153 = vmatprep.subr.bf16.mxu0 0
    %154 = vmatpush1.bf16.msra.mxu0 0
    %155 = vmatprep.subr.bf16.mxu0 0
    %156 = vmatpush1.bf16.msra.mxu0 0
    %157 = vmatprep.subr.bf16.mxu0 0
    %158 = vmatpush1.bf16.msra.mxu0 0
    %159 = vmatprep.subr.bf16.mxu0 0
    %160 = vmatpush1.bf16.msra.mxu0 0
    %161 = vmatprep.subr.bf16.mxu0 0
    %162 = vmatpush1.bf16.msra.mxu0 0
    %163 = vmatprep.subr.bf16.mxu0 0
    %164 = vmatpush1.bf16.msra.mxu0 0
    %165 = vmatprep.subr.bf16.mxu0 0
    %166 = vmatpush1.bf16.msra.mxu0 0
    %167 = vmatprep.subr.bf16.mxu0 0
    %168 = vmatpush1.bf16.msra.mxu0 0
    %169 = vmatprep.subr.bf16.mxu0 0
    %170 = vmatpush1.bf16.msra.mxu0 0
    %171 = vmatprep.mubr.bf16.mxu0 0
    %172 = vmatmul.mubr.bf16.gmra.mrb[0].mxu0 %v137
    %v173 = vpop.f32.mrb[0].mxu0
    %v174 = vadd.f32 %v109, %v173
    %v175 = vpop.f32.mrb[0].mxu0
    %v176 = vpop.f32.mrb[0].mxu0
    %v177 = vadd.f32 %v109, %v176
    %v178 = vpop.f32.mrb[0].mxu0
    %179 = vdwg.mxu0
    %180 = vst.msk [vmem:[#allocation2] sm:$0xff] %vm48, %v174
    %181 = vst.msk [vmem:[#allocation2 + $0x8] sm:$0xff] %vm48, %v177
    // Predicated region
    $region22: #{tpu_custom_call.1} parent=1 // pred_check
      _
    $region23: #{tpu_custom_call.1} parent=1 // pred_check_branch
      %183 = sbr.rel (0) target = $region25
    $region24: #{tpu_custom_call.1} parent=1 // pred_region
      %s185 = ssub.s32 256, 256
      %186 = vsyncadd [#allocation3], %s185
      %s187 = sshll.u32 [#allocation2], 4
      %s188 = int_to_ptr.vmem [resolvable:$true] %s187
      %193 = dma.vmem_to_hbm [thread:$0]  %s188, 256, %s5, [#allocation3], 128, 128, 8
    $region25: #{tpu_custom_call.1} parent=1 // pred_fallthru
      _
    // Predicated region
    $region26: #{tpu_custom_call.1} parent=1 // pred_check
      _
    $region27: #{tpu_custom_call.1} parent=1 // pred_check_branch
      %195 = sbr.rel (0) target = $region29
    $region28: #{tpu_custom_call.1} parent=1 // pred_region
      %196 = dma.done [#allocation3], 256
    $region29: #{tpu_custom_call.1} parent=1 // pred_fallthru
      _
    %197 = vsyncpa [#allocation3], 1

// kernel: tpu_custom_call.1
$region0: #{tpu_custom_call.1}
  #allocation0 [shape = 'u32[]', space=smem, size = 0x4, offset = 0x4, fixed_abs, tag = 'smem constant byte address 0x4 - core index']
  #allocation1 [shape = 'u32[144,128]{1,0:T(1,128)}', space=vmem, size = 0x12000, scoped, tag = 'internal scratch']
  %s0 = inlined_call_operand.vmem [shape: f32[16,32], index: 0, kind: input, shape index: {}]
  %s1 = inlined_call_operand.vmem [shape: bf16[32,64], index: 1, kind: input, shape index: {}]
  %s2 = inlined_call_operand.vmem [shape: f32[1,64], index: 2, kind: input, shape index: {}]
  %s3 = inlined_call_operand.vmem [shape: bf16[64,32], index: 3, kind: input, shape index: {}]
  %s4 = inlined_call_operand.vmem [shape: f32[1,32], index: 4, kind: input, shape index: {}]
  %s5 = inlined_call_operand.hbm [shape: f32[16,32], index: 5, kind: output, shape index: {}]
  %s6 = sld [smem:[#allocation0]]
  $region30: #{tpu_custom_call.1} parent=0
    _
  %s8 = ssub.s32 1, %s6
  %s9 = scalar_select 0, %s8, %s6
  $region1: #{tpu_custom_call.1} parent=0
    #allocation2 [shape = 'u8[8192]{0}', space=vmem, size = 0x2000, scoped, tag = 'output window, operand 0, single buffered']
    #allocation3 [shape = 's32[1]{0}', space=sflag, size = 0x4, scoped, tag = 'scoped memory for tpu_custom_call.1']
    %10 = vsyncpa [#allocation3], 0
    // Predicated region
    $region2: #{tpu_custom_call.1} parent=1 // pred_check
      _
    $region3: #{tpu_custom_call.1} parent=1 // pred_check_branch
      %12 = sbr.rel (0) target = $region5
    $region4: #{tpu_custom_call.1} parent=1 // pred_region
      _
    $region5: #{tpu_custom_call.1} parent=1 // pred_fallthru
      _
    // Predicated region
    $region6: #{tpu_custom_call.1} parent=1 // pred_check
      _
    $region7: #{tpu_custom_call.1} parent=1 // pred_check_branch
      %14 = sbr.rel (0) target = $region9
    $region8: #{tpu_custom_call.1} parent=1 // pred_region
      _
    $region9: #{tpu_custom_call.1} parent=1 // pred_fallthru
      _
    // Predicated region
    $region10: #{tpu_custom_call.1} parent=1 // pred_check
      _
    $region11: #{tpu_custom_call.1} parent=1 // pred_check_branch
      %16 = sbr.rel (0) target = $region13
    $region12: #{tpu_custom_call.1} parent=1 // pred_region
      _
    $region13: #{tpu_custom_call.1} parent=1 // pred_fallthru
      _
    // Predicated region
    $region14: #{tpu_custom_call.1} parent=1 // pred_check
      _
    $region15: #{tpu_custom_call.1} parent=1 // pred_check_branch
      %18 = sbr.rel (0) target = $region17
    $region16: #{tpu_custom_call.1} parent=1 // pred_region
      _
    $region17: #{tpu_custom_call.1} parent=1 // pred_fallthru
      _
    // Predicated region
    $region18: #{tpu_custom_call.1} parent=1 // pred_check
      _
    $region19: #{tpu_custom_call.1} parent=1 // pred_check_branch
      %20 = sbr.rel (0) target = $region21
    $region20: #{tpu_custom_call.1} parent=1 // pred_region
      _
    $region21: #{tpu_custom_call.1} parent=1 // pred_fallthru
      _
    %v22 = vld [vmem:[%s0] sm:$0xff]
    %v23 = vld [vmem:[%s0 + $0x8] sm:$0xff]
    %v24 = vpack.c.bf16 %v23, %v22
    %v25 = vld [vmem:[%s1] sm:$0xf]
    %v26 = vld [vmem:[%s1 + $0x4] sm:$0xf]
    %v27 = vld [vmem:[%s1 + $0x8] sm:$0xf]
    %v28 = vld [vmem:[%s1 + $0xc] sm:$0xf]
    %v29 = vld [vmem:[%s2] sm:$0x1]
    %v31 = vlaneseq
    %v32 = vshrl.u32 %v31, 7
    %v33 = vsub.s32 0, %v32
    %v34 = vrot.slane %v29, %v33
    %v40 = vunpack.c.l.b16 %v25
    %v41 = vunpack.c.l.b16 %v26
    %v42 = vunpack.c.l.b16 %v27
    %v43 = vunpack.c.l.b16 %v28
    %v44 = vpack.c.b16 %v41, %v40
    %v45 = vpack.c.b16 %v43, %v42
    %vm48 = vcmask 261120
    %v50 = vsel %vm48, %v24, 0
    %52 = vmatprep.subr.bf16.mxu0 0
    %53 = vmatpush1.bf16.msra.mxu0 %v44
    %54 = vmatprep.subr.bf16.mxu0 0
    %55 = vmatpush1.bf16.msra.mxu0 %v45
    %56 = vmatprep.subr.bf16.mxu0 0
    %57 = vmatpush1.bf16.msra.mxu0 0
    %58 = vmatprep.subr.bf16.mxu0 0
    %59 = vmatpush1.bf16.msra.mxu0 0
    %60 = vmatprep.subr.bf16.mxu0 0
    %61 = vmatpush1.bf16.msra.mxu0 0
    %62 = vmatprep.subr.bf16.mxu0 0
    %63 = vmatpush1.bf16.msra.mxu0 0
    %64 = vmatprep.subr.bf16.mxu0 0
    %65 = vmatpush1.bf16.msra.mxu0 0
    %66 = vmatprep.subr.bf16.mxu0 0
    %67 = vmatpush1.bf16.msra.mxu0 0
    %68 = vmatprep.subr.bf16.mxu0 0
    %69 = vmatpush1.bf16.msra.mxu0 0
    %70 = vmatprep.subr.bf16.mxu0 0
    %71 = vmatpush1.bf16.msra.mxu0 0
    %72 = vmatprep.subr.bf16.mxu0 0
    %73 = vmatpush1.bf16.msra.mxu0 0
    %74 = vmatprep.subr.bf16.mxu0 0
    %75 = vmatpush1.bf16.msra.mxu0 0
    %76 = vmatprep.subr.bf16.mxu0 0
    %77 = vmatpush1.bf16.msra.mxu0 0
    %78 = vmatprep.subr.bf16.mxu0 0
    %79 = vmatpush1.bf16.msra.mxu0 0
    %80 = vmatprep.subr.bf16.mxu0 0
    %81 = vmatpush1.bf16.msra.mxu0 0
    %82 = vmatprep.subr.bf16.mxu0 0
    %83 = vmatpush1.bf16.msra.mxu0 0
    %84 = vmatprep.mubr.bf16.mxu0 0
    %85 = vmatmul.mubr.bf16.gmra.mrb[0].mxu0 %v50
    %v86 = vpop.f32.mrb[0].mxu0
    %v87 = vadd.f32 %v34, %v86
    %v88 = vpop.f32.mrb[0].mxu0
    %v89 = vpop.f32.mrb[0].mxu0
    %v90 = vadd.f32 %v34, %v89
    %v91 = vpop.f32.mrb[0].mxu0
    %92 = vdwg.mxu0
    %v93 = vmax.f32 %v87, 0.0
    %v94 = vmax.f32 %v90, 0.0
    %v95 = vpack.c.bf16 %v94, %v93
    %v96 = vld [vmem:[%s3] sm:$0xf]
    %v97 = vld [vmem:[%s3 + $0x4] sm:$0xf]
    %v98 = vld [vmem:[%s3 + $0x8] sm:$0xf]
    %v99 = vld [vmem:[%s3 + $0xc] sm:$0xf]
    %v100 = vld [vmem:[%s3 + $0x10] sm:$0xf]
    %v101 = vld [vmem:[%s3 + $0x14] sm:$0xf]
    %v102 = vld [vmem:[%s3 + $0x18] sm:$0xf]
    %v103 = vld [vmem:[%s3 + $0x1c] sm:$0xf]
    %v104 = vld [vmem:[%s4] sm:$0x1]
    %v106 = vlaneseq
    %v107 = vshrl.u32 %v106, 7
    %v108 = vsub.s32 0, %v107
    %v109 = vrot.slane %v104, %v108
    %v119 = vunpack.c.l.b16 %v96
    %v120 = vunpack.c.l.b16 %v97
    %v121 = vunpack.c.l.b16 %v98
    %v122 = vunpack.c.l.b16 %v99
    %v123 = vunpack.c.l.b16 %v100
    %v124 = vunpack.c.l.b16 %v101
    %v125 = vunpack.c.l.b16 %v102
    %v126 = vunpack.c.l.b16 %v103
    %v127 = vpack.c.b16 %v120, %v119
    %v128 = vpack.c.b16 %v122, %v121
    %v129 = vpack.c.b16 %v124, %v123
    %v130 = vpack.c.b16 %v126, %v125
    %vm135 = vcmask 523264
    %v137 = vsel %vm135, %v95, 0
    %139 = vmatprep.subr.bf16.mxu0 0
    %140 = vmatpush1.bf16.msra.mxu0 %v127
    %141 = vmatprep.subr.bf16.mxu0 0
    %142 = vmatpush1.bf16.msra.mxu0 %v128
    %143 = vmatprep.subr.bf16.mxu0 0
    %144 = vmatpush1.bf16.msra.mxu0 %v129
    %145 = vmatprep.subr.bf16.mxu0 0
    %146 = vmatpush1.bf16.msra.mxu0 %v130
    %147 = vmatprep.subr.bf16.mxu0 0
    %148 = vmatpush1.bf16.msra.mxu0 0
    %149 = vmatprep.subr.bf16.mxu0 0
    %150 = vmatpush1.bf16.msra.mxu0 0
    %151 = vmatprep.subr.bf16.mxu0 0
    %152 = vmatpush1.bf16.msra.mxu0 0
    %153 = vmatprep.subr.bf16.mxu0 0
    %154 = vmatpush1.bf16.msra.mxu0 0
    %155 = vmatprep.subr.bf16.mxu0 0
    %156 = vmatpush1.bf16.msra.mxu0 0
    %157 = vmatprep.subr.bf16.mxu0 0
    %158 = vmatpush1.bf16.msra.mxu0 0
    %159 = vmatprep.subr.bf16.mxu0 0
    %160 = vmatpush1.bf16.msra.mxu0 0
    %161 = vmatprep.subr.bf16.mxu0 0
    %162 = vmatpush1.bf16.msra.mxu0 0
    %163 = vmatprep.subr.bf16.mxu0 0
    %164 = vmatpush1.bf16.msra.mxu0 0
    %165 = vmatprep.subr.bf16.mxu0 0
    %166 = vmatpush1.bf16.msra.mxu0 0
    %167 = vmatprep.subr.bf16.mxu0 0
    %168 = vmatpush1.bf16.msra.mxu0 0
    %169 = vmatprep.subr.bf16.mxu0 0
    %170 = vmatpush1.bf16.msra.mxu0 0
    %171 = vmatprep.mubr.bf16.mxu0 0
    %172 = vmatmul.mubr.bf16.gmra.mrb[0].mxu0 %v137
    %v173 = vpop.f32.mrb[0].mxu0
    %v174 = vadd.f32 %v109, %v173
    %v175 = vpop.f32.mrb[0].mxu0
    %v176 = vpop.f32.mrb[0].mxu0
    %v177 = vadd.f32 %v109, %v176
    %v178 = vpop.f32.mrb[0].mxu0
    %179 = vdwg.mxu0
    %180 = vst.msk [vmem:[#allocation2] sm:$0xff] %vm48, %v174
    %181 = vst.msk [vmem:[#allocation2 + $0x8] sm:$0xff] %vm48, %v177
    // Predicated region
    $region22: #{tpu_custom_call.1} parent=1 // pred_check
      _
    $region23: #{tpu_custom_call.1} parent=1 // pred_check_branch
      %183 = sbr.rel (0) target = $region25
    $region24: #{tpu_custom_call.1} parent=1 // pred_region
      %s185 = ssub.s32 256, 256
      %186 = vsyncadd [#allocation3], %s185
      %s187 = sshll.u32 [#allocation2], 4
      %s188 = int_to_ptr.vmem [resolvable:$true] %s187
      %193 = dma.vmem_to_hbm [thread:$0]  %s188, 256, %s5, [#allocation3], 128, 128, 8
    $region25: #{tpu_custom_call.1} parent=1 // pred_fallthru
      _
    // Predicated region
    $region26: #{tpu_custom_call.1} parent=1 // pred_check
      _
    $region27: #{tpu_custom_call.1} parent=1 // pred_check_branch
      %195 = sbr.rel (0) target = $region29
    $region28: #{tpu_custom_call.1} parent=1 // pred_region
      %196 = dma.done [#allocation3], 256
    $region29: #{tpu_custom_call.1} parent=1 // pred_fallthru
      _
    %197 = vsyncpa [#allocation3], 1

</llo_original>
